<compile_context>
chip_gen: v6e
topology: v6e:2x2x1
jax: 0.10.0
libtpu: 0.0.40
codegen_flags: <defaults>
</compile_context>

<pallas_src>
import jax
import jax.numpy as jnp
import numpy as np
from jax.experimental import pallas as pl
from jax.experimental.pallas import tpu as pltpu

# Padded layer widths (true widths 20 / 10 / 5 / 1).  Multiples of 16 so the
# bf16 matmul operands are sublane-pack friendly; f32 intermediates are fine.
P1, P2, P3, P4 = 32, 16, 16, 16
DEFAULT_TILE_B = 256     # batch tile (lane axis of the activations / MXU N dim)


def ffnn_kernel(x_ref, invlen_ref, w1_ref, b1_ref, w2_ref, b2_ref,
                w3_ref, b3_ref, w4_ref, b4_ref, out_ref):
    # x_ref:      (D_pad, TB) bf16  summed GloVe vectors, batch on lanes
    # invlen_ref: (1, TB)     f32   1 / max(#non-pad tokens, 1)
    # wK_ref:     (Pout, Pin) bf16  transposed, zero-padded weights (VMEM-resident)
    # bK_ref:     (Pout, 1)   f32   zero-padded biases (VMEM-resident)
    # out_ref:    (1, TB)     f32   lane-dense output slab (feature row 0 only)

    # Layer 1: masked-mean scale moved after the matmul (column scaling commutes).
    h = jnp.dot(w1_ref[...], x_ref[...], preferred_element_type=jnp.float32)
    h = h * invlen_ref[...] + b1_ref[...]
    h = jnp.maximum(h, 0.0)

    h = jnp.dot(w2_ref[...], h.astype(jnp.bfloat16),
                preferred_element_type=jnp.float32) + b2_ref[...]
    h = jnp.maximum(h, 0.0)

    h = jnp.dot(w3_ref[...], h.astype(jnp.bfloat16),
                preferred_element_type=jnp.float32) + b3_ref[...]
    h = jnp.maximum(h, 0.0)

    o = jnp.dot(w4_ref[...], h.astype(jnp.bfloat16),
                preferred_element_type=jnp.float32) + b4_ref[...]
    out_ref[...] = o[:1, :]          # only feature row 0 is real -> (1, TB)


def ffnn_forward(ids, glove, kernel_params, *, tile_b=DEFAULT_TILE_B):
    """ids: (B, S) int32, glove: (V, D) f32 -> (B, 1) f32 logits."""
    assert tile_b % 128 == 0
    B, _ = ids.shape
    D = glove.shape[1]
    d_pad = pl.cdiv(D, 16) * 16      # bf16 sublane pack, NOT 128

    # ---- XLA glue: embedding gather + unmasked seq-sum + sentence lengths ----
    # Matches nn.Embedding lookup followed by embedded.sum(1) / x.ne(0).sum(1).
    summed = jnp.take(glove, ids, axis=0).sum(axis=1)                    # (B, D) f32
    lengths = jnp.maximum(jnp.sum(ids != 0, axis=1), 1).astype(jnp.float32)
    inv_len = 1.0 / lengths                                              # (B,)

    # Batch padded to a multiple of the tile; batch on lanes, features on sublanes.
    tb = min(tile_b, pl.cdiv(B, 128) * 128)    # don't over-pad tiny batches
    b_pad = pl.cdiv(B, tb) * tb
    grid = (b_pad // tb,)

    x_t = (jnp.zeros((d_pad, b_pad), jnp.bfloat16)
           .at[:D, :B].set(summed.T.astype(jnp.bfloat16)))
    inv_t = jnp.zeros((1, b_pad), jnp.float32).at[0, :B].set(inv_len)

    x_spec = pl.BlockSpec((d_pad, tb), lambda i: (0, i))
    inv_spec = pl.BlockSpec((1, tb), lambda i: (0, i))
    # Constant index_map -> weights/biases fetched once, resident across the grid.
    weight_specs = [pl.BlockSpec(p.shape, lambda i: (0, 0)) for p in kernel_params]

    out = pl.pallas_call(
        ffnn_kernel,
        out_shape=jax.ShapeDtypeStruct((1, b_pad), jnp.float32),
        grid=grid,
        in_specs=[x_spec, inv_spec] + weight_specs,
        out_specs=pl.BlockSpec((1, tb), lambda i: (0, i)),
        compiler_params=pltpu.CompilerParams(
            dimension_semantics=("parallel",),        # megacore split on v7x
            vmem_limit_bytes=32 * 1024 * 1024),
    )(x_t, inv_t, *kernel_params)

    return out[0, :B].reshape(B, 1)   # drop batch padding, (B,) -> (B, 1)


def make_params(key, embedding_dim):
    """Deterministic Linear params.

    Returns (kernel_params, raw_params):
      kernel_params: transposed, zero-padded bf16 weights + f32 biases (kernel layout)
      raw_params:    plain f32 (in, out) weights + (out,) biases for the reference
    """
    d_pad = pl.cdiv(embedding_dim, 16) * 16
    dims = [(embedding_dim, 20), (20, 10), (10, 5), (5, 1)]
    in_pads = [d_pad, P1, P2, P3]
    out_pads = [P1, P2, P3, P4]
    kernel_params, raw = [], []
    for i, (din, dout) in enumerate(dims):
        kw, kb = jax.random.split(jax.random.fold_in(key, i))
        w = jax.random.normal(kw, (din, dout), jnp.float32) * 0.1
        b = jax.random.normal(kb, (dout,), jnp.float32) * 0.1
        w_t = (jnp.zeros((out_pads[i], in_pads[i]), jnp.float32)
               .at[:dout, :din].set(w.T))
        b_t = jnp.zeros((out_pads[i], 1), jnp.float32).at[:dout, 0].set(b)
        kernel_params += [w_t.astype(jnp.bfloat16), b_t]
        raw.append((w, b))
    return kernel_params, raw


def reference(ids, glove, raw_params):
    """Pure-f32 JAX translation of the PyTorch forward (the spec)."""
    emb = glove[ids]                                                 # (B, S, D)
    lengths = jnp.sum(ids != 0, axis=1, keepdims=True).astype(jnp.float32)
    h = emb.sum(axis=1) / lengths
    for i, (w, b) in enumerate(raw_params):
        h = h @ w + b
        if i < len(raw_params) - 1:
            h = jnp.maximum(h, 0.0)
    return h


if __name__ == "__main__":
    key = jax.random.PRNGKey(0)
    B, S, V, D = 512, 12, 100, 32   # batch, seq, vocab_size, embedding_dim
    k_glove, k_ids, k_params = jax.random.split(key, 3)

    glove = jax.random.normal(k_glove, (V, D), jnp.float32)
    glove = glove.at[0].set(0.0)    # conventional zero row for padding id 0

    ids = jax.random.randint(k_ids, (B, S), 1, V, dtype=jnp.int32)
    ids = ids.at[B // 2:, S - 4:].set(0)   # pad the tails; every row keeps >= 8 tokens

    kernel_params, raw_params = make_params(k_params, D)

    out = ffnn_forward(ids, glove, kernel_params)
    out = jax.block_until_ready(out)

    ref = reference(ids, glove, raw_params)
    # bf16 MXU operands (f32 accumulation) vs. a pure-f32 reference -> relaxed tolerance.
    np.testing.assert_allclose(np.asarray(out), np.asarray(ref),
                               rtol=5e-2, atol=5e-3)
    print("KERNEL_OK")
</pallas_src>

<mosaic_0001>
module attributes {stable_mosaic.version = 11 : i64} {
  func.func @ffnn_kernel(%arg0: i32, %arg1: memref<32x256xbf16, #tpu.memory_space<vmem>>, %arg2: memref<1x256xf32, #tpu.memory_space<vmem>>, %arg3: memref<32x32xbf16, #tpu.memory_space<vmem>>, %arg4: memref<32x1xf32, #tpu.memory_space<vmem>>, %arg5: memref<16x32xbf16, #tpu.memory_space<vmem>>, %arg6: memref<16x1xf32, #tpu.memory_space<vmem>>, %arg7: memref<16x16xbf16, #tpu.memory_space<vmem>>, %arg8: memref<16x1xf32, #tpu.memory_space<vmem>>, %arg9: memref<16x16xbf16, #tpu.memory_space<vmem>>, %arg10: memref<16x1xf32, #tpu.memory_space<vmem>>, %arg11: memref<1x256xf32, #tpu.memory_space<vmem>>) attributes {dimension_semantics = [#tpu.dimension_semantics<parallel>], iteration_bounds = array<i64: 2>, scalar_prefetch = 0 : i64, scratch_operands = 0 : i64, tpu.core_type = #tpu.core_type<tc>, window_params = [{transform_indices = @transform_0, window_bounds = array<i64: 32, 256>}, {transform_indices = @transform_1, window_bounds = array<i64: 1, 256>}, {pipeline_mode = #tpu.pipeline_mode<synchronous>, transform_indices = @transform_2, window_bounds = array<i64: 32, 32>}, {pipeline_mode = #tpu.pipeline_mode<synchronous>, transform_indices = @transform_3, window_bounds = array<i64: 32, 1>}, {pipeline_mode = #tpu.pipeline_mode<synchronous>, transform_indices = @transform_4, window_bounds = array<i64: 16, 32>}, {pipeline_mode = #tpu.pipeline_mode<synchronous>, transform_indices = @transform_5, window_bounds = array<i64: 16, 1>}, {pipeline_mode = #tpu.pipeline_mode<synchronous>, transform_indices = @transform_6, window_bounds = array<i64: 16, 16>}, {pipeline_mode = #tpu.pipeline_mode<synchronous>, transform_indices = @transform_7, window_bounds = array<i64: 16, 1>}, {pipeline_mode = #tpu.pipeline_mode<synchronous>, transform_indices = @transform_8, window_bounds = array<i64: 16, 16>}, {pipeline_mode = #tpu.pipeline_mode<synchronous>, transform_indices = @transform_9, window_bounds = array<i64: 16, 1>}, {transform_indices = @transform_10, window_bounds = array<i64: 1, 256>}]} {
    %c0 = arith.constant 0 : index
    %c0_0 = arith.constant 0 : index
    %0 = vector.load %arg3[%c0, %c0_0] : memref<32x32xbf16, #tpu.memory_space<vmem>>, vector<32x32xbf16>
    %c0_1 = arith.constant 0 : index
    %c0_2 = arith.constant 0 : index
    %1 = vector.load %arg1[%c0_1, %c0_2] : memref<32x256xbf16, #tpu.memory_space<vmem>>, vector<32x256xbf16>
    %cst = arith.constant dense<0.000000e+00> : vector<32x256xf32>
    %2 = tpu.matmul %0, %1, %cst {dimension_numbers = #tpu.dot_dimension_numbers<[1], [0], [0], [1], [0, 0, 1, 1], [], []>} : vector<32x32xbf16>, vector<32x256xbf16>, vector<32x256xf32> -> vector<32x256xf32>
    %c0_3 = arith.constant 0 : index
    %c0_4 = arith.constant 0 : index
    %3 = vector.load %arg2[%c0_3, %c0_4] : memref<1x256xf32, #tpu.memory_space<vmem>>, vector<1x256xf32>
    %4 = vector.broadcast %3 : vector<1x256xf32> to vector<32x256xf32>
    %5 = arith.mulf %2, %4 : vector<32x256xf32>
    %c0_5 = arith.constant 0 : index
    %c0_6 = arith.constant 0 : index
    %6 = vector.load %arg4[%c0_5, %c0_6] : memref<32x1xf32, #tpu.memory_space<vmem>>, vector<32x1xf32>
    %7 = vector.broadcast %6 : vector<32x1xf32> to vector<32x256xf32>
    %8 = arith.addf %5, %7 : vector<32x256xf32>
    %cst_7 = arith.constant 0.000000e+00 : f32
    %9 = vector.broadcast %cst_7 : f32 to vector<32x256xf32>
    %10 = arith.maximumf %8, %9 : vector<32x256xf32>
    %c0_8 = arith.constant 0 : index
    %c0_9 = arith.constant 0 : index
    %11 = vector.load %arg5[%c0_8, %c0_9] : memref<16x32xbf16, #tpu.memory_space<vmem>>, vector<16x32xbf16>
    %12 = arith.truncf %10 : vector<32x256xf32> to vector<32x256xbf16>
    %cst_10 = arith.constant dense<0.000000e+00> : vector<16x256xf32>
    %13 = tpu.matmul %11, %12, %cst_10 {dimension_numbers = #tpu.dot_dimension_numbers<[1], [0], [0], [1], [0, 0, 1, 1], [], []>} : vector<16x32xbf16>, vector<32x256xbf16>, vector<16x256xf32> -> vector<16x256xf32>
    %c0_11 = arith.constant 0 : index
    %c0_12 = arith.constant 0 : index
    %14 = vector.load %arg6[%c0_11, %c0_12] : memref<16x1xf32, #tpu.memory_space<vmem>>, vector<16x1xf32>
    %15 = vector.broadcast %14 : vector<16x1xf32> to vector<16x256xf32>
    %16 = arith.addf %13, %15 : vector<16x256xf32>
    %cst_13 = arith.constant 0.000000e+00 : f32
    %17 = vector.broadcast %cst_13 : f32 to vector<16x256xf32>
    %18 = arith.maximumf %16, %17 : vector<16x256xf32>
    %c0_14 = arith.constant 0 : index
    %c0_15 = arith.constant 0 : index
    %19 = vector.load %arg7[%c0_14, %c0_15] : memref<16x16xbf16, #tpu.memory_space<vmem>>, vector<16x16xbf16>
    %20 = arith.truncf %18 : vector<16x256xf32> to vector<16x256xbf16>
    %cst_16 = arith.constant dense<0.000000e+00> : vector<16x256xf32>
    %21 = tpu.matmul %19, %20, %cst_16 {dimension_numbers = #tpu.dot_dimension_numbers<[1], [0], [0], [1], [0, 0, 1, 1], [], []>} : vector<16x16xbf16>, vector<16x256xbf16>, vector<16x256xf32> -> vector<16x256xf32>
    %c0_17 = arith.constant 0 : index
    %c0_18 = arith.constant 0 : index
    %22 = vector.load %arg8[%c0_17, %c0_18] : memref<16x1xf32, #tpu.memory_space<vmem>>, vector<16x1xf32>
    %23 = vector.broadcast %22 : vector<16x1xf32> to vector<16x256xf32>
    %24 = arith.addf %21, %23 : vector<16x256xf32>
    %cst_19 = arith.constant 0.000000e+00 : f32
    %25 = vector.broadcast %cst_19 : f32 to vector<16x256xf32>
    %26 = arith.maximumf %24, %25 : vector<16x256xf32>
    %c0_20 = arith.constant 0 : index
    %c0_21 = arith.constant 0 : index
    %27 = vector.load %arg9[%c0_20, %c0_21] : memref<16x16xbf16, #tpu.memory_space<vmem>>, vector<16x16xbf16>
    %28 = arith.truncf %26 : vector<16x256xf32> to vector<16x256xbf16>
    %cst_22 = arith.constant dense<0.000000e+00> : vector<16x256xf32>
    %29 = tpu.matmul %27, %28, %cst_22 {dimension_numbers = #tpu.dot_dimension_numbers<[1], [0], [0], [1], [0, 0, 1, 1], [], []>} : vector<16x16xbf16>, vector<16x256xbf16>, vector<16x256xf32> -> vector<16x256xf32>
    %c0_23 = arith.constant 0 : index
    %c0_24 = arith.constant 0 : index
    %30 = vector.load %arg10[%c0_23, %c0_24] : memref<16x1xf32, #tpu.memory_space<vmem>>, vector<16x1xf32>
    %31 = vector.broadcast %30 : vector<16x1xf32> to vector<16x256xf32>
    %32 = arith.addf %29, %31 : vector<16x256xf32>
    %33 = vector.extract_strided_slice %32 {offsets = [0, 0], sizes = [1, 256], strides = [1, 1]} : vector<16x256xf32> to vector<1x256xf32>
    %c0_25 = arith.constant 0 : index
    %c0_26 = arith.constant 0 : index
    %34 = vector.load %arg11[%c0_25, %c0_26] : memref<1x256xf32, #tpu.memory_space<vmem>>, vector<1x256xf32>
    tpu.vector_store %arg11[%c0_25, %c0_26], %33 {strides = array<i32>} : memref<1x256xf32, #tpu.memory_space<vmem>>, vector<1x256xf32>,
    return
  }
  func.func @transform_0(%arg0: i32) -> (i32, i32) {
    %c0_i32 = arith.constant 0 : i32
    %c0_i32_0 = arith.constant 0 : i32
    return %c0_i32, %arg0 : i32, i32
  }
  func.func @transform_1(%arg0: i32) -> (i32, i32) {
    %c0_i32 = arith.constant 0 : i32
    %c0_i32_0 = arith.constant 0 : i32
    return %c0_i32, %arg0 : i32, i32
  }
  func.func @transform_2(%arg0: i32) -> (i32, i32) {
    %c0_i32 = arith.constant 0 : i32
    %c0_i32_0 = arith.constant 0 : i32
    %c0_i32_1 = arith.constant 0 : i32
    return %c0_i32, %c0_i32_0 : i32, i32
  }
  func.func @transform_3(%arg0: i32) -> (i32, i32) {
    %c0_i32 = arith.constant 0 : i32
    %c0_i32_0 = arith.constant 0 : i32
    %c0_i32_1 = arith.constant 0 : i32
    return %c0_i32, %c0_i32_0 : i32, i32
  }
  func.func @transform_4(%arg0: i32) -> (i32, i32) {
    %c0_i32 = arith.constant 0 : i32
    %c0_i32_0 = arith.constant 0 : i32
    %c0_i32_1 = arith.constant 0 : i32
    return %c0_i32, %c0_i32_0 : i32, i32
  }
  func.func @transform_5(%arg0: i32) -> (i32, i32) {
    %c0_i32 = arith.constant 0 : i32
    %c0_i32_0 = arith.constant 0 : i32
    %c0_i32_1 = arith.constant 0 : i32
    return %c0_i32, %c0_i32_0 : i32, i32
  }
  func.func @transform_6(%arg0: i32) -> (i32, i32) {
    %c0_i32 = arith.constant 0 : i32
    %c0_i32_0 = arith.constant 0 : i32
    %c0_i32_1 = arith.constant 0 : i32
    return %c0_i32, %c0_i32_0 : i32, i32
  }
  func.func @transform_7(%arg0: i32) -> (i32, i32) {
    %c0_i32 = arith.constant 0 : i32
    %c0_i32_0 = arith.constant 0 : i32
    %c0_i32_1 = arith.constant 0 : i32
    return %c0_i32, %c0_i32_0 : i32, i32
  }
  func.func @transform_8(%arg0: i32) -> (i32, i32) {
    %c0_i32 = arith.constant 0 : i32
    %c0_i32_0 = arith.constant 0 : i32
    %c0_i32_1 = arith.constant 0 : i32
    return %c0_i32, %c0_i32_0 : i32, i32
  }
  func.func @transform_9(%arg0: i32) -> (i32, i32) {
    %c0_i32 = arith.constant 0 : i32
    %c0_i32_0 = arith.constant 0 : i32
    %c0_i32_1 = arith.constant 0 : i32
    return %c0_i32, %c0_i32_0 : i32, i32
  }
  func.func @transform_10(%arg0: i32) -> (i32, i32) {
    %c0_i32 = arith.constant 0 : i32
    %c0_i32_0 = arith.constant 0 : i32
    return %c0_i32, %arg0 : i32, i32
  }
}

</mosaic_0001>

<llo_original>
// kernel: tpu_custom_call.1
$region0: #{tpu_custom_call.1}
  #allocation0 [shape = 'u32[]', space=smem, size = 0x4, offset = 0x4, fixed_abs, tag = 'smem constant byte address 0x4 - core index']
  #allocation1 [shape = 'u32[144,128]{1,0:T(1,128)}', space=vmem, size = 0x12000, scoped, tag = 'internal scratch']
  %s0 = inlined_call_operand.vmem [shape: bf16[32,512], index: 0, kind: input, shape index: {}]
  %s1 = inlined_call_operand.hbm [shape: f32[1,512], index: 1, kind: input, shape index: {}]
  %s2 = inlined_call_operand.vmem [shape: bf16[32,32], index: 2, kind: input, shape index: {}]
  %s3 = inlined_call_operand.vmem [shape: f32[32,1], index: 3, kind: input, shape index: {}]
  %s4 = inlined_call_operand.vmem [shape: bf16[16,32], index: 4, kind: input, shape index: {}]
  %s5 = inlined_call_operand.vmem [shape: f32[16,1], index: 5, kind: input, shape index: {}]
  %s6 = inlined_call_operand.hbm [shape: bf16[16,16], index: 6, kind: input, shape index: {}]
  %s7 = inlined_call_operand.vmem [shape: f32[16,1], index: 7, kind: input, shape index: {}]
  %s8 = inlined_call_operand.vmem [shape: bf16[16,16], index: 8, kind: input, shape index: {}]
  %s9 = inlined_call_operand.vmem [shape: f32[16,1], index: 9, kind: input, shape index: {}]
  %s10 = inlined_call_operand.hbm [shape: f32[1,512], index: 10, kind: output, shape index: {}]
  %s11 = sld [smem:[#allocation0]]
  $region119: #{tpu_custom_call.1} parent=0
    _
  %s13 = ssub.s32 1, %s11
  %s14 = scalar_select 0, %s13, %s11
  $region1: #{tpu_custom_call.1} parent=0
    #allocation2 [shape = 'u8[32768]{0}', space=vmem, size = 0x8000, scoped, tag = 'input window, operand 0']
    #allocation3 [shape = 'u8[2048]{0}', space=vmem, size = 0x800, scoped, tag = 'input window, operand 1']
    #allocation4 [shape = 's32[2]{0}', space=sflag, size = 0x8, scoped, tag = 'scoped memory for tpu_custom_call.1']
    #allocation5 [shape = 's32[2]{0}', space=sflag, size = 0x8, scoped, tag = 'scoped memory for tpu_custom_call.1']
    #allocation6 [shape = 'u8[4096]{0}', space=vmem, size = 0x1000, scoped, tag = 'input window, operand 6, single buffered']
    #allocation7 [shape = 's32[1]{0}', space=sflag, size = 0x4, scoped, tag = 'scoped memory for tpu_custom_call.1']
    #allocation8 [shape = 'u8[2048]{0}', space=vmem, size = 0x800, scoped, tag = 'output window, operand 0']
    %15 = vsyncpa [#allocation4], 0
    %s16 = scalar_lea.sflag [#allocation4], 1
    %17 = vsyncpa %s16, 0
    %18 = vsyncpa [#allocation7], 0
    %19 = vsyncpa [#allocation5], 0
    %s20 = scalar_lea.sflag [#allocation5], 1
    %21 = vsyncpa %s20, 0
    loop: start=0, step=1, limit=4
    $region2: #{tpu_custom_call.1} parent=1 // loop_pre_header
      _
    $region3: #{tpu_custom_call.1} parent=1 // loop_header
      %s23 = sphi 0, %s27
      %p24 = scmp.ge.s32.totalorder %s23, 4
      %s33 = sphi 0, %s35
      %s36 = sphi 0, %s33
      %s37 = sphi 0, %s36
      %s53 = sphi 0, %s37
      %s59 = sphi 0, %s61
      %s62 = sphi 0, %s59
      %s63 = sphi 0, %s62
      %s79 = sphi 0, %s63
      %s83 = sphi 0, %s83
      %s85 = sphi 0, %s83
      %s86 = sphi 0, %s85
      %s100 = sphi 0, %s86
      %s104 = sphi 0, %s104
      %s106 = sphi 0, %s104
      %s107 = sphi 0, %s106
      %s121 = sphi 0, %s107
      %s125 = sphi 0, %s125
      %s127 = sphi 0, %s125
      %s128 = sphi 0, %s127
      %s142 = sphi 0, %s128
      %s146 = sphi 0, %s146
      %s148 = sphi 0, %s146
      %s149 = sphi 0, %s148
      %s163 = sphi 0, %s149
      %s167 = sphi 0, %s167
      %s169 = sphi 0, %s167
      %s170 = sphi 0, %s169
      %s184 = sphi 0, %s170
      %s188 = sphi 0, %s188
      %s190 = sphi 0, %s188
      %s191 = sphi 0, %s190
      %s205 = sphi 0, %s191
      %s209 = sphi 0, %s209
      %s211 = sphi 0, %s209
      %s212 = sphi 0, %s211
      %s226 = sphi 0, %s212
      %s230 = sphi 0, %s230
      %s232 = sphi 0, %s230
      %s233 = sphi 0, %s232
      %s247 = sphi 0, %s233
      %s253 = sphi 0, %s255
      %s256 = sphi 0, %s253
      %s257 = sphi 0, %s256
      %s273 = sphi 0, %s257
    $region4: #{tpu_custom_call.1} parent=1 // loop_header_branch
      %26 = sbr.rel (%p24) target = $region8
    $region5: #{tpu_custom_call.1} parent=1 // loop_body
      %s28 = ssub.s32 %s23, 1
      %s29 = ssub.s32 %s23, 2
      %s30 = sadd.s32 %s23, 1
      %s31 = ssub.s32 %s23, %s30
      %p32 = scmp.eq.s32.totalorder %s31, 0
      %s34 = sadd.s32 %s33, 1
      %s35 = scalar_select %p32, %s33, %s34
      %p38 = pneg %p32
      %p39 = scmp.eq.s32.totalorder %s23, 1
      %p40 = por %p38, %p39
      %p41 = scmp.ne.s32.totalorder %s33, %s36
      %p42 = scmp.eq.s32.totalorder %s23, 0
      %p43 = por %p41, %p42
      %p44 = scmp.ne.s32.totalorder %s33, %s36
      %p45 = scmp.eq.s32.totalorder %s28, 1
      %p46 = por %p44, %p45
      %p47 = scmp.ne.s32.totalorder %s36, %s37
      %p48 = scmp.eq.s32.totalorder %s28, 0
      %p49 = por %p47, %p48
      %p50 = scmp.ne.s32.totalorder %s36, %s37
      %p51 = scmp.eq.s32.totalorder %s29, 1
      %p52 = por %p50, %p51
      %p54 = scmp.ne.s32.totalorder %s37, %s53
      %p55 = scmp.eq.s32.totalorder %s29, 0
      %p56 = por %p54, %p55
      %s57 = ssub.s32 %s23, %s30
      %p58 = scmp.eq.s32.totalorder %s57, 0
      %s60 = sadd.s32 %s59, 1
      %s61 = scalar_select %p58, %s59, %s60
      %p64 = pneg %p58
      %p65 = scmp.eq.s32.totalorder %s23, 1
      %p66 = por %p64, %p65
      %p67 = scmp.ne.s32.totalorder %s59, %s62
      %p68 = scmp.eq.s32.totalorder %s23, 0
      %p69 = por %p67, %p68
      %p70 = scmp.ne.s32.totalorder %s59, %s62
      %p71 = scmp.eq.s32.totalorder %s28, 1
      %p72 = por %p70, %p71
      %p73 = scmp.ne.s32.totalorder %s62, %s63
      %p74 = scmp.eq.s32.totalorder %s28, 0
      %p75 = por %p73, %p74
      %p76 = scmp.ne.s32.totalorder %s62, %s63
      %p77 = scmp.eq.s32.totalorder %s29, 1
      %p78 = por %p76, %p77
      %p80 = scmp.ne.s32.totalorder %s63, %s79
      %p81 = scmp.eq.s32.totalorder %s29, 0
      %p82 = por %p80, %p81
      %s84 = sadd.s32 %s83, 1
      %p87 = scmp.eq.s32.totalorder %s23, 1
      %p88 = scmp.ne.s32.totalorder %s83, %s85
      %p89 = scmp.eq.s32.totalorder %s23, 0
      %p90 = por %p88, %p89
      %p91 = scmp.ne.s32.totalorder %s83, %s85
      %p92 = scmp.eq.s32.totalorder %s28, 1
      %p93 = por %p91, %p92
      %p94 = scmp.ne.s32.totalorder %s85, %s86
      %p95 = scmp.eq.s32.totalorder %s28, 0
      %p96 = por %p94, %p95
      %p97 = scmp.ne.s32.totalorder %s85, %s86
      %p98 = scmp.eq.s32.totalorder %s29, 1
      %p99 = por %p97, %p98
      %p101 = scmp.ne.s32.totalorder %s86, %s100
      %p102 = scmp.eq.s32.totalorder %s29, 0
      %p103 = por %p101, %p102
      %s105 = sadd.s32 %s104, 1
      %p108 = scmp.eq.s32.totalorder %s23, 1
      %p109 = scmp.ne.s32.totalorder %s104, %s106
      %p110 = scmp.eq.s32.totalorder %s23, 0
      %p111 = por %p109, %p110
      %p112 = scmp.ne.s32.totalorder %s104, %s106
      %p113 = scmp.eq.s32.totalorder %s28, 1
      %p114 = por %p112, %p113
      %p115 = scmp.ne.s32.totalorder %s106, %s107
      %p116 = scmp.eq.s32.totalorder %s28, 0
      %p117 = por %p115, %p116
      %p118 = scmp.ne.s32.totalorder %s106, %s107
      %p119 = scmp.eq.s32.totalorder %s29, 1
      %p120 = por %p118, %p119
      %p122 = scmp.ne.s32.totalorder %s107, %s121
      %p123 = scmp.eq.s32.totalorder %s29, 0
      %p124 = por %p122, %p123
      %s126 = sadd.s32 %s125, 1
      %p129 = scmp.eq.s32.totalorder %s23, 1
      %p130 = scmp.ne.s32.totalorder %s125, %s127
      %p131 = scmp.eq.s32.totalorder %s23, 0
      %p132 = por %p130, %p131
      %p133 = scmp.ne.s32.totalorder %s125, %s127
      %p134 = scmp.eq.s32.totalorder %s28, 1
      %p135 = por %p133, %p134
      %p136 = scmp.ne.s32.totalorder %s127, %s128
      %p137 = scmp.eq.s32.totalorder %s28, 0
      %p138 = por %p136, %p137
      %p139 = scmp.ne.s32.totalorder %s127, %s128
      %p140 = scmp.eq.s32.totalorder %s29, 1
      %p141 = por %p139, %p140
      %p143 = scmp.ne.s32.totalorder %s128, %s142
      %p144 = scmp.eq.s32.totalorder %s29, 0
      %p145 = por %p143, %p144
      %s147 = sadd.s32 %s146, 1
      %p150 = scmp.eq.s32.totalorder %s23, 1
      %p151 = scmp.ne.s32.totalorder %s146, %s148
      %p152 = scmp.eq.s32.totalorder %s23, 0
      %p153 = por %p151, %p152
      %p154 = scmp.ne.s32.totalorder %s146, %s148
      %p155 = scmp.eq.s32.totalorder %s28, 1
      %p156 = por %p154, %p155
      %p157 = scmp.ne.s32.totalorder %s148, %s149
      %p158 = scmp.eq.s32.totalorder %s28, 0
      %p159 = por %p157, %p158
      %p160 = scmp.ne.s32.totalorder %s148, %s149
      %p161 = scmp.eq.s32.totalorder %s29, 1
      %p162 = por %p160, %p161
      %p164 = scmp.ne.s32.totalorder %s149, %s163
      %p165 = scmp.eq.s32.totalorder %s29, 0
      %p166 = por %p164, %p165
      %s168 = sadd.s32 %s167, 1
      %p171 = scmp.eq.s32.totalorder %s23, 1
      %p172 = scmp.ne.s32.totalorder %s167, %s169
      %p173 = scmp.eq.s32.totalorder %s23, 0
      %p174 = por %p172, %p173
      %p175 = scmp.ne.s32.totalorder %s167, %s169
      %p176 = scmp.eq.s32.totalorder %s28, 1
      %p177 = por %p175, %p176
      %p178 = scmp.ne.s32.totalorder %s169, %s170
      %p179 = scmp.eq.s32.totalorder %s28, 0
      %p180 = por %p178, %p179
      %p181 = scmp.ne.s32.totalorder %s169, %s170
      %p182 = scmp.eq.s32.totalorder %s29, 1
      %p183 = por %p181, %p182
      %p185 = scmp.ne.s32.totalorder %s170, %s184
      %p186 = scmp.eq.s32.totalorder %s29, 0
      %p187 = por %p185, %p186
      %s189 = sadd.s32 %s188, 1
      %p192 = scmp.eq.s32.totalorder %s23, 1
      %p193 = scmp.ne.s32.totalorder %s188, %s190
      %p194 = scmp.eq.s32.totalorder %s23, 0
      %p195 = por %p193, %p194
      %p196 = scmp.ne.s32.totalorder %s188, %s190
      %p197 = scmp.eq.s32.totalorder %s28, 1
      %p198 = por %p196, %p197
      %p199 = scmp.ne.s32.totalorder %s190, %s191
      %p200 = scmp.eq.s32.totalorder %s28, 0
      %p201 = por %p199, %p200
      %p202 = scmp.ne.s32.totalorder %s190, %s191
      %p203 = scmp.eq.s32.totalorder %s29, 1
      %p204 = por %p202, %p203
      %p206 = scmp.ne.s32.totalorder %s191, %s205
      %p207 = scmp.eq.s32.totalorder %s29, 0
      %p208 = por %p206, %p207
      %s210 = sadd.s32 %s209, 1
      %p213 = scmp.eq.s32.totalorder %s23, 1
      %p214 = scmp.ne.s32.totalorder %s209, %s211
      %p215 = scmp.eq.s32.totalorder %s23, 0
      %p216 = por %p214, %p215
      %p217 = scmp.ne.s32.totalorder %s209, %s211
      %p218 = scmp.eq.s32.totalorder %s28, 1
      %p219 = por %p217, %p218
      %p220 = scmp.ne.s32.totalorder %s211, %s212
      %p221 = scmp.eq.s32.totalorder %s28, 0
      %p222 = por %p220, %p221
      %p223 = scmp.ne.s32.totalorder %s211, %s212
      %p224 = scmp.eq.s32.totalorder %s29, 1
      %p225 = por %p223, %p224
      %p227 = scmp.ne.s32.totalorder %s212, %s226
      %p228 = scmp.eq.s32.totalorder %s29, 0
      %p229 = por %p227, %p228
      %s231 = sadd.s32 %s230, 1
      %p234 = scmp.eq.s32.totalorder %s23, 1
      %p235 = scmp.ne.s32.totalorder %s230, %s232
      %p236 = scmp.eq.s32.totalorder %s23, 0
      %p237 = por %p235, %p236
      %p238 = scmp.ne.s32.totalorder %s230, %s232
      %p239 = scmp.eq.s32.totalorder %s28, 1
      %p240 = por %p238, %p239
      %p241 = scmp.ne.s32.totalorder %s232, %s233
      %p242 = scmp.eq.s32.totalorder %s28, 0
      %p243 = por %p241, %p242
      %p244 = scmp.ne.s32.totalorder %s232, %s233
      %p245 = scmp.eq.s32.totalorder %s29, 1
      %p246 = por %p244, %p245
      %p248 = scmp.ne.s32.totalorder %s233, %s247
      %p249 = scmp.eq.s32.totalorder %s29, 0
      %p250 = por %p248, %p249
      %s251 = ssub.s32 %s23, %s30
      %p252 = scmp.eq.s32.totalorder %s251, 0
      %s254 = sadd.s32 %s253, 1
      %s255 = scalar_select %p252, %s253, %s254
      %p258 = pneg %p252
      %p259 = scmp.eq.s32.totalorder %s23, 1
      %p260 = por %p258, %p259
      %p261 = scmp.ne.s32.totalorder %s253, %s256
      %p262 = scmp.eq.s32.totalorder %s23, 0
      %p263 = por %p261, %p262
      %p264 = scmp.ne.s32.totalorder %s253, %s256
      %p265 = scmp.eq.s32.totalorder %s28, 1
      %p266 = por %p264, %p265
      %p267 = scmp.ne.s32.totalorder %s256, %s257
      %p268 = scmp.eq.s32.totalorder %s28, 0
      %p269 = por %p267, %p268
      %p270 = scmp.ne.s32.totalorder %s256, %s257
      %p271 = scmp.eq.s32.totalorder %s29, 1
      %p272 = por %p270, %p271
      %p274 = scmp.ne.s32.totalorder %s257, %s273
      %p275 = scmp.eq.s32.totalorder %s29, 0
      %p276 = por %p274, %p275
      %p277 = scmp.le.s32.totalorder 1, %s23
      %p278 = scmp.lt.s32.totalorder %s23, 3
      %p279 = pnand %p277, %p278
      %p280 = pneg %p279
      // Predicated region
      $region9: #{tpu_custom_call.1} parent=5 // pred_check
        _
      $region10: #{tpu_custom_call.1} parent=5 // pred_check_branch
        %282 = sbr.rel (%p279) target = $region12
      $region11: #{tpu_custom_call.1} parent=5 // pred_region
        %s283 = ssub.s32 %s23, 1
        // Predicated region
        $region13: #{tpu_custom_call.1} parent=11 // pred_check
          %p284 = pneg %p96
        $region14: #{tpu_custom_call.1} parent=11 // pred_check_branch
          %286 = sbr.rel (%p284) target = $region16
        $region15: #{tpu_custom_call.1} parent=11 // pred_region
          _
        $region16: #{tpu_custom_call.1} parent=11 // pred_fallthru
          _
        // Predicated region
        $region17: #{tpu_custom_call.1} parent=11 // pred_check
          %p287 = pneg %p117
        $region18: #{tpu_custom_call.1} parent=11 // pred_check_branch
          %289 = sbr.rel (%p287) target = $region20
        $region19: #{tpu_custom_call.1} parent=11 // pred_region
          _
        $region20: #{tpu_custom_call.1} parent=11 // pred_fallthru
          _
        // Predicated region
        $region21: #{tpu_custom_call.1} parent=11 // pred_check
          %p290 = pneg %p138
        $region22: #{tpu_custom_call.1} parent=11 // pred_check_branch
          %292 = sbr.rel (%p290) target = $region24
        $region23: #{tpu_custom_call.1} parent=11 // pred_region
          _
        $region24: #{tpu_custom_call.1} parent=11 // pred_fallthru
          _
        // Predicated region
        $region25: #{tpu_custom_call.1} parent=11 // pred_check
          %p293 = pneg %p159
        $region26: #{tpu_custom_call.1} parent=11 // pred_check_branch
          %295 = sbr.rel (%p293) target = $region28
        $region27: #{tpu_custom_call.1} parent=11 // pred_region
          _
        $region28: #{tpu_custom_call.1} parent=11 // pred_fallthru
          _
        // Predicated region
        $region29: #{tpu_custom_call.1} parent=11 // pred_check
          %p296 = pneg %p180
        $region30: #{tpu_custom_call.1} parent=11 // pred_check_branch
          %298 = sbr.rel (%p296) target = $region32
        $region31: #{tpu_custom_call.1} parent=11 // pred_region
          %s300 = ssub.s32 128, 128
          %301 = vsyncadd [#allocation7], %s300
          %s302 = sshll.u32 [#allocation6], 4
          %s303 = int_to_ptr.vmem [resolvable:$true] %s302
          %308 = dma.hbm_to_vmem [thread:$0]  %s6, 128, %s303, [#allocation7], 64, 64, 4
        $region32: #{tpu_custom_call.1} parent=11 // pred_fallthru
          _
        // Predicated region
        $region33: #{tpu_custom_call.1} parent=11 // pred_check
          %p309 = pneg %p201
        $region34: #{tpu_custom_call.1} parent=11 // pred_check_branch
          %311 = sbr.rel (%p309) target = $region36
        $region35: #{tpu_custom_call.1} parent=11 // pred_region
          _
        $region36: #{tpu_custom_call.1} parent=11 // pred_fallthru
          _
        // Predicated region
        $region37: #{tpu_custom_call.1} parent=11 // pred_check
          %p312 = pneg %p222
        $region38: #{tpu_custom_call.1} parent=11 // pred_check_branch
          %314 = sbr.rel (%p312) target = $region40
        $region39: #{tpu_custom_call.1} parent=11 // pred_region
          _
        $region40: #{tpu_custom_call.1} parent=11 // pred_fallthru
          _
        // Predicated region
        $region41: #{tpu_custom_call.1} parent=11 // pred_check
          %p315 = pneg %p243
        $region42: #{tpu_custom_call.1} parent=11 // pred_check_branch
          %317 = sbr.rel (%p315) target = $region44
        $region43: #{tpu_custom_call.1} parent=11 // pred_region
          _
        $region44: #{tpu_custom_call.1} parent=11 // pred_fallthru
          _
      $region12: #{tpu_custom_call.1} parent=5 // pred_fallthru
        _
      %p318 = scmp.lt.s32.totalorder %s23, 2
      // Predicated region
      $region45: #{tpu_custom_call.1} parent=5 // pred_check
        %p319 = pneg %p318
      $region46: #{tpu_custom_call.1} parent=5 // pred_check_branch
        %321 = sbr.rel (%p319) target = $region48
      $region47: #{tpu_custom_call.1} parent=5 // pred_region
        // Predicated region
        $region49: #{tpu_custom_call.1} parent=47 // pred_check
          %p322 = pneg %p43
        $region50: #{tpu_custom_call.1} parent=47 // pred_check_branch
          %324 = sbr.rel (%p322) target = $region52
        $region51: #{tpu_custom_call.1} parent=47 // pred_region
          %s325 = sand.u32 %s33, 1
          %s326 = sand.u32 %s33, 1
          %s327 = smul.addr %s326, 32
          %s328 = scalar_lea.vmem [#allocation2], %s327
          %s329 = smul.u32 2, %s23
          %s330 = smul.addr %s329, 4
          %s331 = scalar_lea.vmem %s0, %s330
          // Predicated region
          $region53: #{tpu_custom_call.1} parent=51 // pred_check
            _
          $region54: #{tpu_custom_call.1} parent=51 // pred_check_branch
            %333 = sbr.rel (0) target = $region56
          $region55: #{tpu_custom_call.1} parent=51 // pred_region
            // Predicated region
            $region57: #{tpu_custom_call.1} parent=55 // pred_check
              _
            $region58: #{tpu_custom_call.1} parent=55 // pred_check_branch
              %335 = sbr.rel (0) target = $region60
            $region59: #{tpu_custom_call.1} parent=55 // pred_region
              // Predicated region
              $region72: #{tpu_custom_call.1} parent=59 // pred_check
                _
              $region73: #{tpu_custom_call.1} parent=59 // pred_check_branch
                %357 = sbr.rel (0) target = $region75
              $region74: #{tpu_custom_call.1} parent=59 // pred_region
                loop: start=0, step=1, limit=1
                $region76: #{tpu_custom_call.1} parent=74 // loop_pre_header
                  _
                $region77: #{tpu_custom_call.1} parent=74 // loop_header
                  %s359 = sphi 0, %s363
                  %p360 = scmp.ge.s32.totalorder %s359, 1
                  %s364 = sphi %s331, %s331
                  %s365 = sphi %s328, %s328
                $region78: #{tpu_custom_call.1} parent=74 // loop_header_branch
                  %362 = sbr.rel (%p360) target = $region82
                $region79: #{tpu_custom_call.1} parent=74 // loop_body
                  %v366 = vld [vmem:[%s364] sm:$0xff]
                  %367 = vst [vmem:[%s365] sm:$0xff] %v366
                  %v368 = vld [vmem:[%s364 + $0x10] sm:$0xff]
                  %369 = vst [vmem:[%s365 + $0x8] sm:$0xff] %v368
                  %v370 = vld [vmem:[%s364 + $0x20] sm:$0xff]
                  %371 = vst [vmem:[%s365 + $0x10] sm:$0xff] %v370
                  %v372 = vld [vmem:[%s364 + $0x30] sm:$0xff]
                  %373 = vst [vmem:[%s365 + $0x18] sm:$0xff] %v372
                $region80: #{tpu_custom_call.1} parent=74 // loop_footer
                  %s363 = sadd.s32 1, %s359
                $region81: #{tpu_custom_call.1} parent=74 // loop_footer_branch
                  %358 = sbr.rel target = $region77
                $region82: #{tpu_custom_call.1} parent=74 // loop_exit
                  _
              $region75: #{tpu_custom_call.1} parent=59 // pred_fallthru
                _
              // Predicated region
              $region83: #{tpu_custom_call.1} parent=59 // pred_check
                _
              $region84: #{tpu_custom_call.1} parent=59 // pred_check_branch
                %375 = sbr.rel target = $region86
              $region85: #{tpu_custom_call.1} parent=59 // pred_region
                _
              $region86: #{tpu_custom_call.1} parent=59 // pred_fallthru
                _
            $region60: #{tpu_custom_call.1} parent=55 // pred_fallthru
              _
            // Predicated region
            $region61: #{tpu_custom_call.1} parent=55 // pred_check
              _
            $region62: #{tpu_custom_call.1} parent=55 // pred_check_branch
              %337 = sbr.rel target = $region64
            $region63: #{tpu_custom_call.1} parent=55 // pred_region
              %s339 = ssub.s32 256, 1
              loop: start=0, step=1, limit=1
              $region65: #{tpu_custom_call.1} parent=63 // loop_pre_header
                _
              $region66: #{tpu_custom_call.1} parent=63 // loop_header
                %s341 = sphi 0, %s345
                %p342 = scmp.ge.s32.totalorder %s341, 1
                %s346 = sphi %s331, %s331
                %s347 = sphi %s328, %s328
              $region67: #{tpu_custom_call.1} parent=63 // loop_header_branch
                %344 = sbr.rel (%p342) target = $region71
              $region68: #{tpu_custom_call.1} parent=63 // loop_body
                %v348 = vld [vmem:[%s346] sm:%s339]
                %349 = vst [vmem:[%s347] sm:%s339] %v348
                %v350 = vld [vmem:[%s346 + $0x10] sm:%s339]
                %351 = vst [vmem:[%s347 + $0x8] sm:%s339] %v350
                %v352 = vld [vmem:[%s346 + $0x20] sm:%s339]
                %353 = vst [vmem:[%s347 + $0x10] sm:%s339] %v352
                %v354 = vld [vmem:[%s346 + $0x30] sm:%s339]
                %355 = vst [vmem:[%s347 + $0x18] sm:%s339] %v354
              $region69: #{tpu_custom_call.1} parent=63 // loop_footer
                %s345 = sadd.s32 1, %s341
              $region70: #{tpu_custom_call.1} parent=63 // loop_footer_branch
                %340 = sbr.rel target = $region66
              $region71: #{tpu_custom_call.1} parent=63 // loop_exit
                _
            $region64: #{tpu_custom_call.1} parent=55 // pred_fallthru
              _
          $region56: #{tpu_custom_call.1} parent=51 // pred_fallthru
            _
          %376 = vnop
        $region52: #{tpu_custom_call.1} parent=47 // pred_fallthru
          _
        // Predicated region
        $region87: #{tpu_custom_call.1} parent=47 // pred_check
          %p377 = pneg %p69
        $region88: #{tpu_custom_call.1} parent=47 // pred_check_branch
          %379 = sbr.rel (%p377) target = $region90
        $region89: #{tpu_custom_call.1} parent=47 // pred_region
          %s380 = sand.u32 %s59, 1
          %s381 = scalar_lea.sflag [#allocation4], %s380
          %s382 = sand.u32 %s59, 1
          %s383 = smul.addr %s382, 2
          %s384 = scalar_lea.vmem [#allocation3], %s383
          %s385 = smul.u32 2, %s23
          %s387 = ssub.s32 32, 32
          %388 = vsyncadd %s381, %s387
          %s389 = smul.addr %s385, 16
          %s390 = scalar_lea.hbm %s1, %s389
          %s392 = sshll.u32 %s384, 4
          %s393 = int_to_ptr.vmem [resolvable:$true] %s392
          %395 = dma.hbm_to_vmem [thread:$0]  %s390, 32, %s393, %s381
        $region90: #{tpu_custom_call.1} parent=47 // pred_fallthru
          _
      $region48: #{tpu_custom_call.1} parent=5 // pred_fallthru
        _
      %p396 = scmp.le.s32.totalorder 1, %s23
      %p397 = scmp.lt.s32.totalorder %s23, 3
      %p398 = pnand %p396, %p397
      %p399 = pneg %p398
      // Predicated region
      $region91: #{tpu_custom_call.1} parent=5 // pred_check
        _
      $region92: #{tpu_custom_call.1} parent=5 // pred_check_branch
        %401 = sbr.rel (%p398) target = $region94
      $region93: #{tpu_custom_call.1} parent=5 // pred_region
        %s402 = ssub.s32 %s23, 1
        %s403 = sand.u32 %s36, 1
        %s404 = sand.u32 %s36, 1
        %s405 = smul.addr %s404, 32
        %s406 = scalar_lea.vmem [#allocation2], %s405
        // Predicated region
        $region95: #{tpu_custom_call.1} parent=93 // pred_check
          %p407 = pneg %p49
        $region96: #{tpu_custom_call.1} parent=93 // pred_check_branch
          %409 = sbr.rel (%p407) target = $region98
        $region97: #{tpu_custom_call.1} parent=93 // pred_region
          _
        $region98: #{tpu_custom_call.1} parent=93 // pred_fallthru
          _
        %s410 = sand.u32 %s62, 1
        %s411 = scalar_lea.sflag [#allocation4], %s410
        %s412 = sand.u32 %s62, 1
        %s413 = smul.addr %s412, 2
        %s414 = scalar_lea.vmem [#allocation3], %s413
        // Predicated region
        $region99: #{tpu_custom_call.1} parent=93 // pred_check
          %p415 = pneg %p75
        $region100: #{tpu_custom_call.1} parent=93 // pred_check_branch
          %417 = sbr.rel (%p415) target = $region102
        $region101: #{tpu_custom_call.1} parent=93 // pred_region
          %418 = dma.done %s411, 32
        $region102: #{tpu_custom_call.1} parent=93 // pred_fallthru
          _
        // Predicated region
        $region103: #{tpu_custom_call.1} parent=93 // pred_check
          %p419 = pneg %p180
        $region104: #{tpu_custom_call.1} parent=93 // pred_check_branch
          %421 = sbr.rel (%p419) target = $region106
        $region105: #{tpu_custom_call.1} parent=93 // pred_region
          %422 = dma.done [#allocation7], 128
        $region106: #{tpu_custom_call.1} parent=93 // pred_fallthru
          _
        %s423 = sand.u32 %s36, 1
        %s424 = sand.u32 %s36, 1
        %s425 = smul.addr %s424, 32
        %s426 = scalar_lea.vmem [#allocation2], %s425
        %p427 = pneg %p49
        %p428 = pneg %p46
        %s429 = sand.u32 %s62, 1
        %s430 = scalar_lea.sflag [#allocation4], %s429
        %s431 = sand.u32 %s62, 1
        %s432 = smul.addr %s431, 2
        %s433 = scalar_lea.vmem [#allocation3], %s432
        %p434 = pneg %p75
        %p435 = pneg %p72
        %p436 = pneg %p96
        %p437 = pneg %p93
        %p438 = pneg %p117
        %p439 = pneg %p114
        %p440 = pneg %p138
        %p441 = pneg %p135
        %p442 = pneg %p159
        %p443 = pneg %p156
        %p444 = pneg %p180
        %p445 = pneg %p177
        %p446 = pneg %p201
        %p447 = pneg %p198
        %p448 = pneg %p222
        %p449 = pneg %p219
        %p450 = pneg %p243
        %p451 = pneg %p240
        %p452 = pneg %p269
        %p453 = pneg %p266
        %s454 = sand.u32 %s256, 1
        %s455 = scalar_lea.sflag [#allocation5], %s454
        %s456 = sand.u32 %s256, 1
        %s457 = smul.addr %s456, 2
        %s458 = scalar_lea.vmem [#allocation8], %s457
        %s459 = smul.u32 2, %s28
        %s460 = smul.u32 2, %s28
        %s461 = smul.u32 2, %s28
        %v463 = vld [vmem:[%s2] sm:$0xf]
        %v464 = vld [vmem:[%s2 + $0x4] sm:$0xf]
        %v465 = vld [vmem:[%s2 + $0x8] sm:$0xf]
        %v466 = vld [vmem:[%s2 + $0xc] sm:$0xf]
        %v467 = vld [vmem:[%s406] sm:$0xff]
        %v468 = vld [vmem:[%s406 + $0x8] sm:$0xff]
        %v469 = vld [vmem:[%s406 + $0x10] sm:$0xff]
        %v470 = vld [vmem:[%s406 + $0x18] sm:$0xff]
        %v475 = vunpack.c.l.b16 %v463
        %v476 = vunpack.c.l.b16 %v464
        %v477 = vunpack.c.l.b16 %v465
        %v478 = vunpack.c.l.b16 %v466
        %v479 = vpack.c.b16 %v476, %v475
        %v480 = vpack.c.b16 %v478, %v477
        %v485 = vunpack.c.l.b16 %v467
        %v486 = vunpack.c.h.b16 %v467
        %v487 = vunpack.c.l.b16 %v468
        %v488 = vunpack.c.h.b16 %v468
        %v489 = vunpack.c.l.b16 %v469
        %v490 = vunpack.c.h.b16 %v469
        %v491 = vunpack.c.l.b16 %v470
        %v492 = vunpack.c.h.b16 %v470
        %v493 = vpack.c.b16 %v487, %v485
        %v494 = vpack.c.b16 %v488, %v486
        %v495 = vpack.c.b16 %v491, %v489
        %v496 = vpack.c.b16 %v492, %v490
        %vm501 = vcmask 261120
        %v503 = vsel %vm501, %v479, 0
        %v506 = vsel %vm501, %v480, 0
        %508 = vmatprep.subr.bf16.mxu0 0
        %509 = vmatpush1.bf16.msra.mxu0 0
        %510 = vmatprep.subr.bf16.mxu0 0
        %511 = vmatpush1.bf16.msra.mxu0 0
        %512 = vmatprep.subr.bf16.mxu0 0
        %513 = vmatpush1.bf16.msra.mxu0 0
        %514 = vmatprep.subr.bf16.mxu0 0
        %515 = vmatpush1.bf16.msra.mxu0 0
        %516 = vmatprep.subr.bf16.mxu0 0
        %517 = vmatpush1.bf16.msra.mxu0 0
        %518 = vmatprep.subr.bf16.mxu0 0
        %519 = vmatpush1.bf16.msra.mxu0 0
        %520 = vmatprep.subr.bf16.mxu0 %v496
        %521 = vmatpush1.bf16.msra.mxu0 %v495
        %522 = vmatprep.subr.bf16.mxu0 %v494
        %523 = vmatpush1.bf16.msra.mxu0 %v493
        %524 = vmatprep.subr.bf16.mxu0 0
        %525 = vmatpush2.bf16.msra.mxu0 0
        %526 = vmatprep.subr.bf16.mxu0 0
        %527 = vmatpush2.bf16.msra.mxu0 0
        %528 = vmatprep.subr.bf16.mxu0 0
        %529 = vmatpush2.bf16.msra.mxu0 0
        %530 = vmatprep.subr.bf16.mxu0 0
        %531 = vmatpush2.bf16.msra.mxu0 0
        %532 = vmatprep.subr.bf16.mxu0 0
        %533 = vmatpush2.bf16.msra.mxu0 0
        %534 = vmatprep.subr.bf16.mxu0 0
        %535 = vmatpush2.bf16.msra.mxu0 0
        %536 = vmatprep.subr.bf16.mxu0 0
        %537 = vmatpush2.bf16.msra.mxu0 0
        %538 = vmatprep.subr.bf16.mxu0 0
        %539 = vmatpush2.bf16.msra.mxu0 0
        %540 = vmatprep.mubr.bf16.mxu0 0
        %541 = vmatmul.mubr.bf16.gmra.mxu0 %v503
        %v542 = vpop.f32.mrf.mxu0
        %v543 = vadd.f32 0.0, %v542
        %v544 = vpop.f32.mrf.mxu0
        %v545 = vadd.f32 0.0, %v544
        %v546 = vpop.f32.mrf.mxu0
        %v547 = vadd.f32 0.0, %v546
        %v548 = vpop.f32.mrf.mxu0
        %v549 = vadd.f32 0.0, %v548
        %550 = vmatprep.mubr.bf16.mxu0 0
        %551 = vmatmul.mubr.bf16.gmra.mxu0 %v506
        %v552 = vpop.f32.mrf.mxu0
        %v553 = vadd.f32 0.0, %v552
        %v554 = vpop.f32.mrf.mxu0
        %v555 = vadd.f32 0.0, %v554
        %v556 = vpop.f32.mrf.mxu0
        %v557 = vadd.f32 0.0, %v556
        %v558 = vpop.f32.mrf.mxu0
        %v559 = vadd.f32 0.0, %v558
        %560 = vdwg.mxu0
        %v561 = vld [vmem:[%s414] sm:$0x3]
        %v563 = vlaneseq
        %v564 = vshrl.u32 %v563, 7
        %v565 = vsub.s32 0, %v564
        %v566 = vrot.slane %v561, %v565
        %v567 = vlaneseq
        %v568 = vshrl.u32 %v567, 7
        %v569 = vsub.s32 1, %v568
        %v570 = vrot.slane %v561, %v569
        %v573 = vmul.f32 %v543, %v566
        %v574 = vmul.f32 %v545, %v570
        %v575 = vmul.f32 %v547, %v566
        %v576 = vmul.f32 %v549, %v570
        %v577 = vmul.f32 %v553, %v566
        %v578 = vmul.f32 %v555, %v570
        %v579 = vmul.f32 %v557, %v566
        %v580 = vmul.f32 %v559, %v570
        %v581 = vld [vmem:[%s3] sm:$0xff]
        %v582 = vld [vmem:[%s3 + $0x8] sm:$0xff]
        %v583 = vld [vmem:[%s3 + $0x10] sm:$0xff]
        %v584 = vld [vmem:[%s3 + $0x18] sm:$0xff]
        %586 = vset.pattern.permute.xlu0 0
        %587 = vperm.xlu0 %586, %v581
        %v588 = vpop.permute.xlu0 %587
        %591 = vset.pattern.permute.xlu0 0
        %592 = vperm.xlu0 %591, %v582
        %v593 = vpop.permute.xlu0 %592
        %596 = vset.pattern.permute.xlu0 0
        %597 = vperm.xlu0 %596, %v583
        %v598 = vpop.permute.xlu0 %597
        %601 = vset.pattern.permute.xlu0 0
        %602 = vperm.xlu0 %601, %v584
        %v603 = vpop.permute.xlu0 %602
        %v605 = vadd.f32 %v573, %v588
        %v606 = vadd.f32 %v574, %v588
        %v607 = vadd.f32 %v575, %v593
        %v608 = vadd.f32 %v576, %v593
        %v609 = vadd.f32 %v577, %v598
        %v610 = vadd.f32 %v578, %v598
        %v611 = vadd.f32 %v579, %v603
        %v612 = vadd.f32 %v580, %v603
        %v613 = vmax.f32 %v605, 0.0
        %v614 = vmax.f32 %v606, 0.0
        %v615 = vmax.f32 %v607, 0.0
        %v616 = vmax.f32 %v608, 0.0
        %v617 = vmax.f32 %v609, 0.0
        %v618 = vmax.f32 %v610, 0.0
        %v619 = vmax.f32 %v611, 0.0
        %v620 = vmax.f32 %v612, 0.0
        %v621 = vld [vmem:[%s4] sm:$0xf]
        %v622 = vld [vmem:[%s4 + $0x4] sm:$0xf]
        %v623 = vpack.c.bf16 %v615, %v613
        %v624 = vpack.c.bf16 %v616, %v614
        %v625 = vpack.c.bf16 %v619, %v617
        %v626 = vpack.c.bf16 %v620, %v618
        %v627 = vld [vmem:[%s5] sm:$0xff]
        %v628 = vld [vmem:[%s5 + $0x8] sm:$0xff]
        %630 = vset.pattern.permute.xlu0 0
        %631 = vperm.xlu0 %630, %v627
        %v632 = vpop.permute.xlu0 %631
        %635 = vset.pattern.permute.xlu0 0
        %636 = vperm.xlu0 %635, %v628
        %v637 = vpop.permute.xlu0 %636
        %v641 = vunpack.c.l.b16 %v621
        %v642 = vunpack.c.l.b16 %v622
        %v643 = vpack.c.b16 %v642, %v641
        %v645 = vsel %vm501, %v643, 0
        %647 = vmatprep.subr.bf16.mxu0 0
        %648 = vmatpush1.bf16.msra.mxu0 0
        %649 = vmatprep.subr.bf16.mxu0 0
        %650 = vmatpush1.bf16.msra.mxu0 0
        %651 = vmatprep.subr.bf16.mxu0 0
        %652 = vmatpush1.bf16.msra.mxu0 0
        %653 = vmatprep.subr.bf16.mxu0 0
        %654 = vmatpush1.bf16.msra.mxu0 0
        %655 = vmatprep.subr.bf16.mxu0 0
        %656 = vmatpush1.bf16.msra.mxu0 0
        %657 = vmatprep.subr.bf16.mxu0 0
        %658 = vmatpush1.bf16.msra.mxu0 0
        %659 = vmatprep.subr.bf16.mxu0 %v626
        %660 = vmatpush1.bf16.msra.mxu0 %v625
        %661 = vmatprep.subr.bf16.mxu0 %v624
        %662 = vmatpush1.bf16.msra.mxu0 %v623
        %663 = vmatprep.subr.bf16.mxu0 0
        %664 = vmatpush2.bf16.msra.mxu0 0
        %665 = vmatprep.subr.bf16.mxu0 0
        %666 = vmatpush2.bf16.msra.mxu0 0
        %667 = vmatprep.subr.bf16.mxu0 0
        %668 = vmatpush2.bf16.msra.mxu0 0
        %669 = vmatprep.subr.bf16.mxu0 0
        %670 = vmatpush2.bf16.msra.mxu0 0
        %671 = vmatprep.subr.bf16.mxu0 0
        %672 = vmatpush2.bf16.msra.mxu0 0
        %673 = vmatprep.subr.bf16.mxu0 0
        %674 = vmatpush2.bf16.msra.mxu0 0
        %675 = vmatprep.subr.bf16.mxu0 0
        %676 = vmatpush2.bf16.msra.mxu0 0
        %677 = vmatprep.subr.bf16.mxu0 0
        %678 = vmatpush2.bf16.msra.mxu0 0
        %679 = vmatprep.mubr.bf16.mxu0 0
        %680 = vmatmul.mubr.bf16.gmra.mxu0 %v645
        %v681 = vpop.f32.mrf.mxu0
        %v682 = vadd.f32 %v632, %v681
        %v683 = vpop.f32.mrf.mxu0
        %v684 = vadd.f32 %v632, %v683
        %v685 = vpop.f32.mrf.mxu0
        %v686 = vadd.f32 %v637, %v685
        %v687 = vpop.f32.mrf.mxu0
        %v688 = vadd.f32 %v637, %v687
        %689 = vdwg.mxu0
        %v690 = vmax.f32 %v682, 0.0
        %v691 = vmax.f32 %v684, 0.0
        %v692 = vmax.f32 %v686, 0.0
        %v693 = vmax.f32 %v688, 0.0
        %v694 = vld [vmem:[#allocation6] sm:$0xf]
        %v695 = vld [vmem:[#allocation6 + $0x4] sm:$0xf]
        %v696 = vpack.c.bf16 %v692, %v690
        %v697 = vpack.c.bf16 %v693, %v691
        %v698 = vld [vmem:[%s7] sm:$0xff]
        %v699 = vld [vmem:[%s7 + $0x8] sm:$0xff]
        %701 = vset.pattern.permute.xlu0 0
        %702 = vperm.xlu0 %701, %v698
        %v703 = vpop.permute.xlu0 %702
        %706 = vset.pattern.permute.xlu0 0
        %707 = vperm.xlu0 %706, %v699
        %v708 = vpop.permute.xlu0 %707
        %v712 = vunpack.c.l.b16 %v694
        %v713 = vunpack.c.l.b16 %v695
        %v714 = vpack.c.b16 %v713, %v712
        %vm715 = vcmask 130048
        %v717 = vsel %vm715, %v714, 0
        %719 = vmatprep.subr.bf16.mxu0 0
        %720 = vmatpush1.bf16.msra.mxu0 0
        %721 = vmatprep.subr.bf16.mxu0 0
        %722 = vmatpush1.bf16.msra.mxu0 0
        %723 = vmatprep.subr.bf16.mxu0 0
        %724 = vmatpush1.bf16.msra.mxu0 0
        %725 = vmatprep.subr.bf16.mxu0 0
        %726 = vmatpush1.bf16.msra.mxu0 0
        %727 = vmatprep.subr.bf16.mxu0 0
        %728 = vmatpush1.bf16.msra.mxu0 0
        %729 = vmatprep.subr.bf16.mxu0 0
        %730 = vmatpush1.bf16.msra.mxu0 0
        %731 = vmatprep.subr.bf16.mxu0 0
        %732 = vmatpush1.bf16.msra.mxu0 0
        %733 = vmatprep.subr.bf16.mxu0 %v697
        %734 = vmatpush1.bf16.msra.mxu0 %v696
        %735 = vmatprep.subr.bf16.mxu0 0
        %736 = vmatpush2.bf16.msra.mxu0 0
        %737 = vmatprep.subr.bf16.mxu0 0
        %738 = vmatpush2.bf16.msra.mxu0 0
        %739 = vmatprep.subr.bf16.mxu0 0
        %740 = vmatpush2.bf16.msra.mxu0 0
        %741 = vmatprep.subr.bf16.mxu0 0
        %742 = vmatpush2.bf16.msra.mxu0 0
        %743 = vmatprep.subr.bf16.mxu0 0
        %744 = vmatpush2.bf16.msra.mxu0 0
        %745 = vmatprep.subr.bf16.mxu0 0
        %746 = vmatpush2.bf16.msra.mxu0 0
        %747 = vmatprep.subr.bf16.mxu0 0
        %748 = vmatpush2.bf16.msra.mxu0 0
        %749 = vmatprep.subr.bf16.mxu0 0
        %750 = vmatpush2.bf16.msra.mxu0 0
        %751 = vmatprep.mubr.bf16.mxu0 0
        %752 = vmatmul.mubr.bf16.gmra.mxu0 %v717
        %v753 = vpop.f32.mrf.mxu0
        %v754 = vadd.f32 %v703, %v753
        %v755 = vpop.f32.mrf.mxu0
        %v756 = vadd.f32 %v703, %v755
        %v757 = vpop.f32.mrf.mxu0
        %v758 = vadd.f32 %v708, %v757
        %v759 = vpop.f32.mrf.mxu0
        %v760 = vadd.f32 %v708, %v759
        %761 = vdwg.mxu0
        %v762 = vmax.f32 %v754, 0.0
        %v763 = vmax.f32 %v756, 0.0
        %v764 = vmax.f32 %v758, 0.0
        %v765 = vmax.f32 %v760, 0.0
        %v766 = vld [vmem:[%s8] sm:$0xf]
        %v767 = vld [vmem:[%s8 + $0x4] sm:$0xf]
        %v768 = vpack.c.bf16 %v764, %v762
        %v769 = vpack.c.bf16 %v765, %v763
        %v770 = vld [vmem:[%s9] sm:$0xff]
        %v771 = vld [vmem:[%s9 + $0x8] sm:$0xff]
        %773 = vset.pattern.permute.xlu0 0
        %774 = vperm.xlu0 %773, %v770
        %v775 = vpop.permute.xlu0 %774
        %778 = vset.pattern.permute.xlu0 0
        %779 = vperm.xlu0 %778, %v771
        %v780 = vpop.permute.xlu0 %779
        %v783 = vunpack.c.l.b16 %v766
        %v784 = vunpack.c.l.b16 %v767
        %v785 = vpack.c.b16 %v784, %v783
        %v787 = vsel %vm715, %v785, 0
        %789 = vmatprep.subr.bf16.mxu0 0
        %790 = vmatpush1.bf16.msra.mxu0 0
        %791 = vmatprep.subr.bf16.mxu0 0
        %792 = vmatpush1.bf16.msra.mxu0 0
        %793 = vmatprep.subr.bf16.mxu0 0
        %794 = vmatpush1.bf16.msra.mxu0 0
        %795 = vmatprep.subr.bf16.mxu0 0
        %796 = vmatpush1.bf16.msra.mxu0 0
        %797 = vmatprep.subr.bf16.mxu0 0
        %798 = vmatpush1.bf16.msra.mxu0 0
        %799 = vmatprep.subr.bf16.mxu0 0
        %800 = vmatpush1.bf16.msra.mxu0 0
        %801 = vmatprep.subr.bf16.mxu0 0
        %802 = vmatpush1.bf16.msra.mxu0 0
        %803 = vmatprep.subr.bf16.mxu0 %v769
        %804 = vmatpush1.bf16.msra.mxu0 %v768
        %805 = vmatprep.subr.bf16.mxu0 0
        %806 = vmatpush2.bf16.msra.mxu0 0
        %807 = vmatprep.subr.bf16.mxu0 0
        %808 = vmatpush2.bf16.msra.mxu0 0
        %809 = vmatprep.subr.bf16.mxu0 0
        %810 = vmatpush2.bf16.msra.mxu0 0
        %811 = vmatprep.subr.bf16.mxu0 0
        %812 = vmatpush2.bf16.msra.mxu0 0
        %813 = vmatprep.subr.bf16.mxu0 0
        %814 = vmatpush2.bf16.msra.mxu0 0
        %815 = vmatprep.subr.bf16.mxu0 0
        %816 = vmatpush2.bf16.msra.mxu0 0
        %817 = vmatprep.subr.bf16.mxu0 0
        %818 = vmatpush2.bf16.msra.mxu0 0
        %819 = vmatprep.subr.bf16.mxu0 0
        %820 = vmatpush2.bf16.msra.mxu0 0
        %821 = vmatprep.mubr.bf16.mxu0 0
        %822 = vmatmul.mubr.bf16.gmra.mxu0 %v787
        %v823 = vpop.f32.mrf.mxu0
        %v824 = vadd.f32 %v775, %v823
        %v825 = vpop.f32.mrf.mxu0
        %v826 = vadd.f32 %v775, %v825
        %v827 = vpop.f32.mrf.mxu0
        %v828 = vpop.f32.mrf.mxu0
        %829 = vdwg.mxu0
        %v832 = vcombine.low %v824, %v826
        %v834 = vunpack.c.l.s4 1966171168
        %v835 = vunpack.c.0.s8 %v834
        %v836 = vlaneseq
        %v837 = vshrl.u32 %v836, 7
        %v838 = vsub.s32 %v835, %v837
        %v839 = vrot.slane %v832, %v838
        %v841 = vunpack.c.l.s4 1966171168
        %v842 = vunpack.c.0.s8 %v841
        %v843 = vlaneseq
        %v844 = vshrl.u32 %v843, 7
        %v845 = vsub.s32 %v842, %v844
        %v846 = vrot.slane %v839, %v845
        %v848 = vlaneseq
        %vm849 = vcmp.ge.s32.totalorder %v848, 0
        %vm850 = vcmp.lt.s32.totalorder %v848, 256
        %vm851 = vmand %vm849, %vm850
        %852 = vst.msk [vmem:[%s458] sm:$0x3] %vm851, %v846
        %s853 = sand.u32 %s256, 1
        %s854 = scalar_lea.sflag [#allocation5], %s853
        %s855 = sand.u32 %s256, 1
        %s856 = smul.addr %s855, 2
        %s857 = scalar_lea.vmem [#allocation8], %s856
        // Predicated region
        $region107: #{tpu_custom_call.1} parent=93 // pred_check
          %p858 = pneg %p266
        $region108: #{tpu_custom_call.1} parent=93 // pred_check_branch
          %860 = sbr.rel (%p858) target = $region110
        $region109: #{tpu_custom_call.1} parent=93 // pred_region
          %s861 = smul.u32 2, %s28
          %s863 = ssub.s32 32, 32
          %864 = vsyncadd %s854, %s863
          %s865 = smul.addr %s861, 16
          %s866 = scalar_lea.hbm %s10, %s865
          %s868 = sshll.u32 %s857, 4
          %s869 = int_to_ptr.vmem [resolvable:$true] %s868
          %871 = dma.vmem_to_hbm [thread:$0]  %s869, 32, %s866, %s854
        $region110: #{tpu_custom_call.1} parent=93 // pred_fallthru
          _
      $region94: #{tpu_custom_call.1} parent=5 // pred_fallthru
        _
      %p872 = scmp.le.s32.totalorder 2, %s23
      // Predicated region
      $region111: #{tpu_custom_call.1} parent=5 // pred_check
        %p873 = pneg %p872
      $region112: #{tpu_custom_call.1} parent=5 // pred_check_branch
        %875 = sbr.rel (%p873) target = $region114
      $region113: #{tpu_custom_call.1} parent=5 // pred_region
        %s876 = ssub.s32 %s23, 2
        // Predicated region
        $region115: #{tpu_custom_call.1} parent=113 // pred_check
          %p877 = pneg %p272
        $region116: #{tpu_custom_call.1} parent=113 // pred_check_branch
          %879 = sbr.rel (%p877) target = $region118
        $region117: #{tpu_custom_call.1} parent=113 // pred_region
          %s880 = sand.u32 %s257, 1
          %s881 = scalar_lea.sflag [#allocation5], %s880
          %s882 = sand.u32 %s257, 1
          %s883 = smul.addr %s882, 2
          %s884 = scalar_lea.vmem [#allocation8], %s883
          %885 = dma.done %s881, 32
        $region118: #{tpu_custom_call.1} parent=113 // pred_fallthru
          _
      $region114: #{tpu_custom_call.1} parent=5 // pred_fallthru
        _
    $region6: #{tpu_custom_call.1} parent=1 // loop_footer
      %s27 = sadd.s32 1, %s23
    $region7: #{tpu_custom_call.1} parent=1 // loop_footer_branch
      %22 = sbr.rel target = $region3
    $region8: #{tpu_custom_call.1} parent=1 // loop_exit
      _
    %886 = vsyncpa [#allocation4], 1
    %s887 = scalar_lea.sflag [#allocation4], 1
    %888 = vsyncpa %s887, 1
    %889 = vsyncpa [#allocation7], 1
    %890 = vsyncpa [#allocation5], 1
    %s891 = scalar_lea.sflag [#allocation5], 1
    %892 = vsyncpa %s891, 1

</llo_original>
